<compile_context>
chip_gen: v7x
topology: tpu7x:2x2x1
jax: 0.10.0
libtpu: 0.0.40
codegen_flags: <defaults>
</compile_context>

<pallas_src>
import jax
import jax.numpy as jnp
from jax.experimental import pallas as pl
from jax.experimental.pallas import tpu as pltpu


def _linterp_kernel(y_ref, xnew_ref, out_ref):
    # y_ref    : (TB, NP)
    # xnew_ref : (1, TQ)
    # out_ref  : (TB, TQ)
    NP = y_ref.shape[1]
    TQ = out_ref.shape[1]

    xnew = xnew_ref[...].astype(jnp.float32)                 # (1, TQ)

    # Analytic index + weight on the uniform grid.
    t = xnew * jnp.float32(NP - 1)                           # (1, TQ)
    idx_f = jnp.clip(jnp.floor(t), 0.0, jnp.float32(NP - 2))  # (1, TQ)
    idx = idx_f.astype(jnp.int32)                            # (1, TQ)
    w = t - idx_f                                            # (1, TQ)

    # Single int iota; fused one-hot-lerp selector matrix (NP, TQ).
    j = jax.lax.broadcasted_iota(jnp.int32, (NP, TQ), 0)     # (NP, TQ)
    sel = jnp.where(j == idx, 1.0 - w, 0.0) + jnp.where(j == idx + 1, w, 0.0)

    # One MXU matmul does gather(y1, y2) + lerp in a single pass.
    y = y_ref[...].astype(jnp.float32)                       # (TB, NP)
    out_ref[...] = jnp.dot(y, sel,
                           preferred_element_type=jnp.float32).astype(out_ref.dtype)


def _round_up(x: int, m: int) -> int:
    return ((x + m - 1) // m) * m


def linear_interpolation(y_points: jax.Array, x_new: jax.Array) -> jax.Array:
    """y_points: (B, NP), x_new: (Q,) -> (B, Q) float32."""
    B, NP = y_points.shape
    Q = x_new.shape[0]

    # Lane-dense output: pad Q to 128 lanes, B to 8 sublanes.
    B_pad = _round_up(B, 8)
    Q_pad = _round_up(Q, 128)

    # Tile sizes (conservative for v7x's smaller VMEM; plenty for v5e/v6e).
    TB = min(B_pad, 256)
    TQ = min(Q_pad, 1024)
    B_pad = _round_up(B_pad, TB)
    Q_pad = _round_up(Q_pad, TQ)

    y_p = y_points
    if B_pad != B:
        y_p = jnp.pad(y_points, ((0, B_pad - B), (0, 0)))
    x_p = x_new.astype(jnp.float32)
    if Q_pad != Q:
        x_p = jnp.pad(x_p, (0, Q_pad - Q))
    x_p = x_p.reshape(1, Q_pad)

    grid = (B_pad // TB, Q_pad // TQ)

    out = pl.pallas_call(
        _linterp_kernel,
        out_shape=jax.ShapeDtypeStruct((B_pad, Q_pad), jnp.float32),
        grid_spec=pltpu.PrefetchScalarGridSpec(
            num_scalar_prefetch=0,
            grid=grid,
            in_specs=[
                pl.BlockSpec((TB, NP), lambda i, j: (i, 0)),
                pl.BlockSpec((1, TQ), lambda i, j: (0, j)),
            ],
            out_specs=pl.BlockSpec((TB, TQ), lambda i, j: (i, j)),
        ),
        compiler_params=pltpu.CompilerParams(
            dimension_semantics=("parallel", "parallel")),
    )(y_p, x_p)

    return out[:B, :Q]


def _reference(y_points, x_new):
    """Plain-JAX mirror of the PyTorch forward for validation."""
    B, NP = y_points.shape
    xp = jnp.linspace(0.0, 1.0, NP)
    idxs = jnp.searchsorted(xp, x_new, side="right") - 1
    idxs = jnp.clip(idxs, 0, NP - 2)
    x1 = xp[idxs]
    x2 = xp[idxs + 1]
    y1 = y_points[:, idxs]
    y2 = y_points[:, idxs + 1]
    w = (x_new - x1) / (x2 - x1)
    return y1 + w[None, :] * (y2 - y1)


if __name__ == "__main__":
    key = jax.random.PRNGKey(0)
    k1, k2 = jax.random.split(key)

    B, NP, Q = 4, 16, 8
    # y_points plays the role of the tensor stored in __init__; x_new is the
    # forward input.
    y_points = jax.random.normal(k1, (B, NP), dtype=jnp.float32)
    x_new = jax.random.uniform(k2, (Q,), dtype=jnp.float32)  # in [0, 1)

    out = linear_interpolation(y_points, x_new)
    out = jax.block_until_ready(out)

    ref = _reference(y_points, x_new)
    assert out.shape == (B, Q)
    assert jnp.allclose(out, ref, atol=1e-5, rtol=1e-5), (out, ref)

    print("KERNEL_OK")
</pallas_src>

<mosaic_0001>
module attributes {stable_mosaic.version = 11 : i64} {
  func.func @_linterp_kernel(%arg0: i32, %arg1: i32, %arg2: memref<8x16xf32, #tpu.memory_space<vmem>>, %arg3: memref<1x128xf32, #tpu.memory_space<vmem>>, %arg4: memref<8x128xf32, #tpu.memory_space<vmem>>) attributes {dimension_semantics = [#tpu.dimension_semantics<parallel>, #tpu.dimension_semantics<parallel>], iteration_bounds = array<i64: 1, 1>, scalar_prefetch = 0 : i64, scratch_operands = 0 : i64, tpu.core_type = #tpu.core_type<tc>, window_params = [{transform_indices = @transform_0, window_bounds = array<i64: 8, 16>}, {transform_indices = @transform_1, window_bounds = array<i64: 1, 128>}, {transform_indices = @transform_2, window_bounds = array<i64: 8, 128>}]} {
    %c0 = arith.constant 0 : index
    %c0_0 = arith.constant 0 : index
    %0 = vector.load %arg3[%c0, %c0_0] : memref<1x128xf32, #tpu.memory_space<vmem>>, vector<1x128xf32>
    %cst = arith.constant 1.500000e+01 : f32
    %1 = vector.broadcast %cst : f32 to vector<1x128xf32>
    %2 = arith.mulf %0, %1 : vector<1x128xf32>
    %3 = math.floor %2 : vector<1x128xf32>
    %cst_1 = arith.constant 0.000000e+00 : f32
    %cst_2 = arith.constant 1.400000e+01 : f32
    %4 = vector.broadcast %cst_1 : f32 to vector<1x128xf32>
    %5 = arith.maximumf %4, %3 : vector<1x128xf32>
    %6 = vector.broadcast %cst_2 : f32 to vector<1x128xf32>
    %7 = arith.minimumf %6, %5 : vector<1x128xf32>
    %8 = arith.fptosi %7 : vector<1x128xf32> to vector<1x128xi32>
    %9 = arith.subf %2, %7 : vector<1x128xf32>
    %10 = tpu.iota {dimensions = array<i32: 0>} : vector<16x128xi32>
    %11 = vector.broadcast %8 : vector<1x128xi32> to vector<16x128xi32>
    %12 = arith.cmpi eq, %10, %11 : vector<16x128xi32>
    %cst_3 = arith.constant 1.000000e+00 : f32
    %13 = vector.broadcast %cst_3 : f32 to vector<1x128xf32>
    %14 = arith.subf %13, %9 : vector<1x128xf32>
    %cst_4 = arith.constant 0.000000e+00 : f32
    %15 = vector.shape_cast %14 : vector<1x128xf32> to vector<1x128xf32>
    %16 = vector.broadcast %15 : vector<1x128xf32> to vector<16x128xf32>
    %17 = vector.broadcast %cst_4 : f32 to vector<16x128xf32>
    %18 = arith.select %12, %16, %17 : vector<16x128xi1>, vector<16x128xf32>
    %c1_i32 = arith.constant 1 : i32
    %19 = vector.broadcast %c1_i32 : i32 to vector<1x128xi32>
    %20 = arith.addi %8, %19 : vector<1x128xi32>
    %21 = vector.broadcast %20 : vector<1x128xi32> to vector<16x128xi32>
    %22 = arith.cmpi eq, %10, %21 : vector<16x128xi32>
    %cst_5 = arith.constant 0.000000e+00 : f32
    %23 = vector.shape_cast %9 : vector<1x128xf32> to vector<1x128xf32>
    %24 = vector.broadcast %23 : vector<1x128xf32> to vector<16x128xf32>
    %25 = vector.broadcast %cst_5 : f32 to vector<16x128xf32>
    %26 = arith.select %22, %24, %25 : vector<16x128xi1>, vector<16x128xf32>
    %27 = arith.addf %18, %26 : vector<16x128xf32>
    %c0_6 = arith.constant 0 : index
    %c0_7 = arith.constant 0 : index
    %28 = vector.load %arg2[%c0_6, %c0_7] : memref<8x16xf32, #tpu.memory_space<vmem>>, vector<8x16xf32>
    %cst_8 = arith.constant dense<0.000000e+00> : vector<8x128xf32>
    %29 = tpu.matmul %28, %27, %cst_8 {dimension_numbers = #tpu.dot_dimension_numbers<[1], [0], [0], [1], [0, 0, 1, 1], [], []>} : vector<8x16xf32>, vector<16x128xf32>, vector<8x128xf32> -> vector<8x128xf32>
    %c0_9 = arith.constant 0 : index
    %c0_10 = arith.constant 0 : index
    %30 = vector.load %arg4[%c0_9, %c0_10] : memref<8x128xf32, #tpu.memory_space<vmem>>, vector<8x128xf32>
    tpu.vector_store %arg4[%c0_9, %c0_10], %29 {strides = array<i32>} : memref<8x128xf32, #tpu.memory_space<vmem>>, vector<8x128xf32>,
    return
  }
  func.func @transform_0(%arg0: i32, %arg1: i32) -> (i32, i32) {
    %c0_i32 = arith.constant 0 : i32
    %c0_i32_0 = arith.constant 0 : i32
    return %arg0, %c0_i32 : i32, i32
  }
  func.func @transform_1(%arg0: i32, %arg1: i32) -> (i32, i32) {
    %c0_i32 = arith.constant 0 : i32
    %c0_i32_0 = arith.constant 0 : i32
    return %c0_i32, %arg1 : i32, i32
  }
  func.func @transform_2(%arg0: i32, %arg1: i32) -> (i32, i32) {
    %c0_i32 = arith.constant 0 : i32
    return %arg0, %arg1 : i32, i32
  }
}

</mosaic_0001>

<llo_original>
// kernel: tpu_custom_call.1
$region0: #{tpu_custom_call.1}
  #allocation0 [shape = 'u32[]', space=smem, size = 0x4, offset = 0x4, fixed_abs, tag = 'smem constant byte address 0x4 - core index']
  #allocation1 [shape = 'u32[144,128]{1,0:T(1,128)}', space=vmem, size = 0x12000, scoped, tag = 'internal scratch']
  %s0 = inlined_call_operand.hbm [shape: f32[8,16], index: 0, kind: input, shape index: {}]
  %s1 = inlined_call_operand.vmem [shape: f32[1,128], index: 1, kind: input, shape index: {}]
  %s2 = inlined_call_operand.hbm [shape: f32[8,128], index: 2, kind: output, shape index: {}]
  %s3 = sld [smem:[#allocation0]]
  $region22: #{tpu_custom_call.1} parent=0
    _
  %s5 = ssub.s32 1, %s3
  %s6 = scalar_select 0, %s5, %s3
  $region1: #{tpu_custom_call.1} parent=0
    #allocation2 [shape = 'u8[4096]{0}', space=vmem, size = 0x1000, scoped, tag = 'input window, operand 0, single buffered']
    #allocation3 [shape = 's32[1]{0}', space=sflag, size = 0x4, scoped, tag = 'scoped memory for tpu_custom_call.1']
    #allocation4 [shape = 's32[1]{0}', space=sflag, size = 0x4, scoped, tag = 'scoped memory for tpu_custom_call.1']
    #allocation5 [shape = 'u8[4096]{0}', space=vmem, size = 0x1000, scoped, tag = 'output window, operand 0, single buffered']
    %7 = vsyncpa [#allocation3], 0
    %8 = vsyncpa [#allocation4], 0
    // Predicated region
    $region2: #{tpu_custom_call.1} parent=1 // pred_check
      _
    $region3: #{tpu_custom_call.1} parent=1 // pred_check_branch
      %10 = sbr.rel (0) target = $region5
    $region4: #{tpu_custom_call.1} parent=1 // pred_region
      %s12 = ssub.s32 128, 128
      %13 = vsyncadd [#allocation3], %s12
      %s15 = sshll.u32 [#allocation2], 4
      %s16 = int_to_ptr.vmem [resolvable:$true] %s15
      %18 = dma.hbm_to_vmem [thread:$0]  %s0, 128, %s16, [#allocation3]
    $region5: #{tpu_custom_call.1} parent=1 // pred_fallthru
      _
    // Predicated region
    $region6: #{tpu_custom_call.1} parent=1 // pred_check
      _
    $region7: #{tpu_custom_call.1} parent=1 // pred_check_branch
      %20 = sbr.rel (0) target = $region9
    $region8: #{tpu_custom_call.1} parent=1 // pred_region
      _
    $region9: #{tpu_custom_call.1} parent=1 // pred_fallthru
      _
    // Predicated region
    $region10: #{tpu_custom_call.1} parent=1 // pred_check
      _
    $region11: #{tpu_custom_call.1} parent=1 // pred_check_branch
      %22 = sbr.rel (0) target = $region13
    $region12: #{tpu_custom_call.1} parent=1 // pred_region
      %23 = dma.done [#allocation3], 128
    $region13: #{tpu_custom_call.1} parent=1 // pred_fallthru
      _
    %v24 = vld [vmem:[%s1] sm:$0x1]
    %v25 = vmul.f32 %v24, 15.0
    %v26 = vfloor.f32 %v25
    %v27 = vmax.f32 %v26, 0.0
    %v28 = vmin.f32 %v27, 14.0
    %v29 = vcvt.f32.s32.to.zero.pseudo %v28
    %v30 = vsub.f32 %v25, %v28
    %v31 = vlaneseq
    %v32 = vshrl.u32 %v31, 7
    %v33 = vadd.s32 %v32, 8
    %v34 = vlaneseq
    %v35 = vshrl.u32 %v34, 7
    %v36 = vsub.s32 0, %v35
    %v37 = vrot.slane %v29, %v36
    %vm38 = vcmp.eq.s32.totalorder %v32, %v37
    %vm39 = vcmp.eq.s32.totalorder %v33, %v37
    %v40 = vsub.f32 1.0, %v30
    %v42 = vlaneseq
    %v43 = vshrl.u32 %v42, 7
    %v44 = vsub.s32 0, %v43
    %v45 = vrot.slane %v40, %v44
    %v47 = vsel %vm38, %v45, 0.0
    %v48 = vsel %vm39, %v45, 0.0
    %v49 = vadd.s32 %v29, 1
    %v50 = vlaneseq
    %v51 = vshrl.u32 %v50, 7
    %v52 = vsub.s32 0, %v51
    %v53 = vrot.slane %v49, %v52
    %vm54 = vcmp.eq.s32.totalorder %v32, %v53
    %vm55 = vcmp.eq.s32.totalorder %v33, %v53
    %v57 = vlaneseq
    %v58 = vshrl.u32 %v57, 7
    %v59 = vsub.s32 0, %v58
    %v60 = vrot.slane %v30, %v59
    %v62 = vsel %vm54, %v60, 0.0
    %v63 = vsel %vm55, %v60, 0.0
    %v64 = vadd.f32 %v47, %v62
    %v65 = vadd.f32 %v48, %v63
    %v66 = vld [vmem:[#allocation2] sm:$0xff]
    %vm67 = vcmask 130048
    %v69 = vsel %vm67, %v66, 0
    %71 = vmatprep.subr.mxu0 0.0
    %72 = vmatpush1.msra.mxu0 %v64
    %73 = vmatprep.subr.mxu0 0.0
    %74 = vmatpush1.msra.mxu0 %v65
    %75 = vmatprep.subr.mxu0 0.0
    %76 = vmatpush1.msra.mxu0 0.0
    %77 = vmatprep.subr.mxu0 0.0
    %78 = vmatpush1.msra.mxu0 0.0
    %79 = vmatprep.subr.mxu0 0.0
    %80 = vmatpush1.msra.mxu0 0.0
    %81 = vmatprep.subr.mxu0 0.0
    %82 = vmatpush1.msra.mxu0 0.0
    %83 = vmatprep.subr.mxu0 0.0
    %84 = vmatpush1.msra.mxu0 0.0
    %85 = vmatprep.subr.mxu0 0.0
    %86 = vmatpush1.msra.mxu0 0.0
    %87 = vmatprep.subr.mxu0 0.0
    %88 = vmatpush1.msra.mxu0 0.0
    %89 = vmatprep.subr.mxu0 0.0
    %90 = vmatpush1.msra.mxu0 0.0
    %91 = vmatprep.subr.mxu0 0.0
    %92 = vmatpush1.msra.mxu0 0.0
    %93 = vmatprep.subr.mxu0 0.0
    %94 = vmatpush1.msra.mxu0 0.0
    %95 = vmatprep.subr.mxu0 0.0
    %96 = vmatpush1.msra.mxu0 0.0
    %97 = vmatprep.subr.mxu0 0.0
    %98 = vmatpush1.msra.mxu0 0.0
    %99 = vmatprep.subr.mxu0 0.0
    %100 = vmatpush1.msra.mxu0 0.0
    %101 = vmatprep.subr.mxu0 0.0
    %102 = vmatpush1.msra.mxu0 0.0
    %103 = vmatprep.subr.mxu0 0.0
    %104 = vmatpush1.msra.mxu0 0.0
    %105 = vmatprep.subr.mxu0 0.0
    %106 = vmatpush1.msra.mxu0 0.0
    %107 = vmatprep.subr.mxu0 0.0
    %108 = vmatpush1.msra.mxu0 0.0
    %109 = vmatprep.subr.mxu0 0.0
    %110 = vmatpush1.msra.mxu0 0.0
    %111 = vmatprep.subr.mxu0 0.0
    %112 = vmatpush1.msra.mxu0 0.0
    %113 = vmatprep.subr.mxu0 0.0
    %114 = vmatpush1.msra.mxu0 0.0
    %115 = vmatprep.subr.mxu0 0.0
    %116 = vmatpush1.msra.mxu0 0.0
    %117 = vmatprep.subr.mxu0 0.0
    %118 = vmatpush1.msra.mxu0 0.0
    %119 = vmatprep.subr.mxu0 0.0
    %120 = vmatpush1.msra.mxu0 0.0
    %121 = vmatprep.subr.mxu0 0.0
    %122 = vmatpush1.msra.mxu0 0.0
    %123 = vmatprep.subr.mxu0 0.0
    %124 = vmatpush1.msra.mxu0 0.0
    %125 = vmatprep.subr.mxu0 0.0
    %126 = vmatpush1.msra.mxu0 0.0
    %127 = vmatprep.subr.mxu0 0.0
    %128 = vmatpush1.msra.mxu0 0.0
    %129 = vmatprep.subr.mxu0 0.0
    %130 = vmatpush1.msra.mxu0 0.0
    %131 = vmatprep.subr.mxu0 0.0
    %132 = vmatpush1.msra.mxu0 0.0
    %133 = vmatprep.subr.mxu0 0.0
    %134 = vmatpush1.msra.mxu0 0.0
    %135 = vmatprep.mubr.f32.mxu0 0.0
    %136 = vmatmul.mubr.f32.gmra.mrb[0].mxu0 %v69
    %v137 = vpop.f32.mrb[0].mxu0
    %v138 = vadd.f32 0.0, %v137
    %v139 = vpop.f32.mrb[0].mxu0
    %140 = vdwg.mxu0
    %141 = vst [vmem:[#allocation5] sm:$0xff] %v138
    // Predicated region
    $region14: #{tpu_custom_call.1} parent=1 // pred_check
      _
    $region15: #{tpu_custom_call.1} parent=1 // pred_check_branch
      %143 = sbr.rel (0) target = $region17
    $region16: #{tpu_custom_call.1} parent=1 // pred_region
      %s145 = ssub.s32 128, 128
      %146 = vsyncadd [#allocation4], %s145
      %s148 = sshll.u32 [#allocation5], 4
      %s149 = int_to_ptr.vmem [resolvable:$true] %s148
      %151 = dma.vmem_to_hbm [thread:$0]  %s149, 128, %s2, [#allocation4]
    $region17: #{tpu_custom_call.1} parent=1 // pred_fallthru
      _
    // Predicated region
    $region18: #{tpu_custom_call.1} parent=1 // pred_check
      _
    $region19: #{tpu_custom_call.1} parent=1 // pred_check_branch
      %153 = sbr.rel (0) target = $region21
    $region20: #{tpu_custom_call.1} parent=1 // pred_region
      %154 = dma.done [#allocation4], 128
    $region21: #{tpu_custom_call.1} parent=1 // pred_fallthru
      _
    %155 = vsyncpa [#allocation3], 1
    %156 = vsyncpa [#allocation4], 1

</llo_original>
